<compile_context>
chip_gen: v7x
topology: tpu7x:2x2x1
jax: 0.10.0
libtpu: 0.0.40
codegen_flags: <defaults>
</compile_context>

<pallas_src>
import jax
import jax.numpy as jnp
from jax.experimental import pallas as pl
from jax.experimental.pallas import tpu as pltpu

NUM_CLASSES = 10           # P.NUM_CLASSES (synthetic)
INPUT_SHAPE = (4, 16, 16)  # P.INPUT_SHAPE (synthetic small shape: C, H, W)
EPS = 1e-10                # epsilon used by vector_proj2d's norm division

LANE = 128                 # vreg lane width
SUBLANE = 8                # vreg sublane count (f32)
MAX_BATCH_TILE = 512       # batch tile upper bound (fits v7x 64 MiB VMEM easily)


def _round_up(x, m):
    return ((x + m - 1) // m) * m


def hebb_fc_kernel(x_ref, wt_ref, inv_norm_ref, o_ref):
    # x_ref:        (TN, D)   bf16   batch tile
    # wt_ref:       (D, Kp)   bf16   pre-transposed weights (resident: constant block idx)
    # inv_norm_ref: (1, Kp)   f32    precomputed 1 / (||w_k|| + eps), lane-major
    # o_ref:        (TN, Kp)  f32    lane-dense output tile
    scores = jnp.dot(
        x_ref[...], wt_ref[...],
        preferred_element_type=jnp.float32,   # MXU matmul, f32 accumulation
    )
    # lane-major broadcast multiply; no transpose, no divide in the hot loop.
    o_ref[...] = scores * inv_norm_ref[...]


def net_forward(x, weight, *, force_pallas=True):
    """x: (N, C, H, W); weight: (K, C, H, W) -> {'fc': (N, K)} float32."""
    n = x.shape[0]
    c, h, w = INPUT_SHAPE
    d = c * h * w
    k = weight.shape[0]

    x_flat = x.reshape(n, d)
    w_flat = weight.reshape(k, d)

    # Hoisted, exact f32 denominator of the vector projection (tiny K*D op).
    inv_norm = 1.0 / (jnp.linalg.norm(w_flat.astype(jnp.float32), axis=1) + EPS)  # (K,)

    if not force_pallas and n * k * d < (1 << 22):
        # Tiny problems are dominated by standalone custom-call dispatch
        # overhead: fall back to plain XLA (same math, exact f32).
        fc = (x_flat.astype(jnp.float32) @ w_flat.astype(jnp.float32).T) * inv_norm[None, :]
        return {"fc": fc}

    # Padded / tiled shapes: lane-dense K, sublane-aligned batch tiles.
    k_pad = _round_up(k, LANE)
    tn = min(MAX_BATCH_TILE, _round_up(n, SUBLANE))
    n_pad = _round_up(n, tn)

    # bf16 MXU operands (f32 accumulation inside the kernel).
    x_p = jnp.zeros((n_pad, d), jnp.bfloat16).at[:n].set(x_flat.astype(jnp.bfloat16))
    wt_p = jnp.zeros((d, k_pad), jnp.bfloat16).at[:, :k].set(w_flat.astype(jnp.bfloat16).T)
    inv_norm_p = jnp.zeros((1, k_pad), jnp.float32).at[0, :k].set(inv_norm)

    grid = (n_pad // tn,)

    # Explicit VMEM budget: double-buffered bf16 inputs + f32 output tile.
    vmem_bytes = (2 * (tn * d + d * k_pad) * 2   # x tile + resident weights (bf16)
                  + 2 * k_pad * 4                # inv_norm (f32)
                  + 2 * tn * k_pad * 4)          # output tile (f32)
    vmem_limit = min(max(2 * vmem_bytes, 16 << 20), 64 << 20)

    fc_padded = pl.pallas_call(
        hebb_fc_kernel,
        out_shape=jax.ShapeDtypeStruct((n_pad, k_pad), jnp.float32),
        grid_spec=pltpu.PrefetchScalarGridSpec(
            num_scalar_prefetch=0,
            grid=grid,
            in_specs=[
                pl.BlockSpec((tn, d), lambda i: (i, 0)),       # batch tile
                pl.BlockSpec((d, k_pad), lambda i: (0, 0)),    # weights: constant -> resident
                pl.BlockSpec((1, k_pad), lambda i: (0, 0)),    # inv_norm: constant -> resident
            ],
            out_specs=pl.BlockSpec((tn, k_pad), lambda i: (i, 0)),
        ),
        compiler_params=pltpu.CompilerParams(
            dimension_semantics=("parallel",),   # shard batch tiles across TCs (v7x)
            vmem_limit_bytes=vmem_limit,
        ),
    )(x_p, wt_p, inv_norm_p)

    # Strip lane/sublane padding; Net.forward returns {'fc': (N, NUM_CLASSES)}.
    fc = fc_padded[:n, :k]
    return {"fc": fc}


if __name__ == "__main__":
    key = jax.random.PRNGKey(0)
    kx, kw = jax.random.split(key)

    batch = 2
    c, h, w = INPUT_SHAPE
    x = jax.random.normal(kx, (batch, c, h, w), dtype=jnp.float32)
    # Deterministic synthetic weights for the HebbianMap2d "fc" layer:
    # shape (out_channels=NUM_CLASSES, in_channels=C, kh=H, kw=W)
    weight = jax.random.normal(kw, (NUM_CLASSES, c, h, w), dtype=jnp.float32)

    out = net_forward(x, weight, force_pallas=True)
    fc = jax.block_until_ready(out["fc"])

    # Sanity check against plain-JAX f32 reference of vector_proj2d.
    x_flat = x.reshape(batch, -1)
    w_flat = weight.reshape(NUM_CLASSES, -1)
    ref = (x_flat @ w_flat.T) / (jnp.linalg.norm(w_flat, axis=1) + EPS)
    assert fc.shape == (batch, NUM_CLASSES)
    # bf16 MXU operands (f32 accumulation) vs f32 reference: bf16-level tolerance.
    assert jnp.allclose(fc, ref, rtol=3e-2, atol=3e-2), float(jnp.max(jnp.abs(fc - ref)))

    # TODO(synk): training-time Hebbian weight update (lrn_sim=raised_cos2d_pow(2),
    # RULE_BASE, teacher signal) is not part of the inference forward and is omitted.
    print("KERNEL_OK")
</pallas_src>

<mosaic_0001>
module attributes {stable_mosaic.version = 11 : i64} {
  func.func @hebb_fc_kernel(%arg0: i32, %arg1: memref<8x1024xbf16, #tpu.memory_space<vmem>>, %arg2: memref<1024x128xbf16, #tpu.memory_space<vmem>>, %arg3: memref<1x128xf32, #tpu.memory_space<vmem>>, %arg4: memref<8x128xf32, #tpu.memory_space<vmem>>) attributes {dimension_semantics = [#tpu.dimension_semantics<parallel>], iteration_bounds = array<i64: 1>, scalar_prefetch = 0 : i64, scratch_operands = 0 : i64, tpu.core_type = #tpu.core_type<tc>, window_params = [{transform_indices = @transform_0, window_bounds = array<i64: 8, 1024>}, {pipeline_mode = #tpu.pipeline_mode<synchronous>, transform_indices = @transform_1, window_bounds = array<i64: 1024, 128>}, {pipeline_mode = #tpu.pipeline_mode<synchronous>, transform_indices = @transform_2, window_bounds = array<i64: 1, 128>}, {transform_indices = @transform_3, window_bounds = array<i64: 8, 128>}]} {
    %c0 = arith.constant 0 : index
    %c0_0 = arith.constant 0 : index
    %0 = vector.load %arg1[%c0, %c0_0] : memref<8x1024xbf16, #tpu.memory_space<vmem>>, vector<8x1024xbf16>
    %c0_1 = arith.constant 0 : index
    %c0_2 = arith.constant 0 : index
    %1 = vector.load %arg2[%c0_1, %c0_2] : memref<1024x128xbf16, #tpu.memory_space<vmem>>, vector<1024x128xbf16>
    %cst = arith.constant dense<0.000000e+00> : vector<8x128xf32>
    %2 = tpu.matmul %0, %1, %cst {dimension_numbers = #tpu.dot_dimension_numbers<[1], [0], [0], [1], [0, 0, 1, 1], [], []>} : vector<8x1024xbf16>, vector<1024x128xbf16>, vector<8x128xf32> -> vector<8x128xf32>
    %c0_3 = arith.constant 0 : index
    %c0_4 = arith.constant 0 : index
    %3 = vector.load %arg3[%c0_3, %c0_4] : memref<1x128xf32, #tpu.memory_space<vmem>>, vector<1x128xf32>
    %4 = vector.broadcast %3 : vector<1x128xf32> to vector<8x128xf32>
    %5 = arith.mulf %2, %4 : vector<8x128xf32>
    %c0_5 = arith.constant 0 : index
    %c0_6 = arith.constant 0 : index
    %6 = vector.load %arg4[%c0_5, %c0_6] : memref<8x128xf32, #tpu.memory_space<vmem>>, vector<8x128xf32>
    tpu.vector_store %arg4[%c0_5, %c0_6], %5 {strides = array<i32>} : memref<8x128xf32, #tpu.memory_space<vmem>>, vector<8x128xf32>,
    return
  }
  func.func @transform_0(%arg0: i32) -> (i32, i32) {
    %c0_i32 = arith.constant 0 : i32
    %c0_i32_0 = arith.constant 0 : i32
    return %arg0, %c0_i32 : i32, i32
  }
  func.func @transform_1(%arg0: i32) -> (i32, i32) {
    %c0_i32 = arith.constant 0 : i32
    %c0_i32_0 = arith.constant 0 : i32
    %c0_i32_1 = arith.constant 0 : i32
    return %c0_i32, %c0_i32_0 : i32, i32
  }
  func.func @transform_2(%arg0: i32) -> (i32, i32) {
    %c0_i32 = arith.constant 0 : i32
    %c0_i32_0 = arith.constant 0 : i32
    %c0_i32_1 = arith.constant 0 : i32
    return %c0_i32, %c0_i32_0 : i32, i32
  }
  func.func @transform_3(%arg0: i32) -> (i32, i32) {
    %c0_i32 = arith.constant 0 : i32
    %c0_i32_0 = arith.constant 0 : i32
    return %arg0, %c0_i32 : i32, i32
  }
}

</mosaic_0001>

<llo_original>
// kernel: tpu_custom_call.1
$region0: #{tpu_custom_call.1}
  #allocation0 [shape = 'u32[]', space=smem, size = 0x4, offset = 0x4, fixed_abs, tag = 'smem constant byte address 0x4 - core index']
  #allocation1 [shape = 'u32[144,128]{1,0:T(1,128)}', space=vmem, size = 0x12000, scoped, tag = 'internal scratch']
  %s0 = inlined_call_operand.hbm [shape: bf16[8,1024], index: 0, kind: input, shape index: {}]
  %s1 = inlined_call_operand.hbm [shape: bf16[1024,128], index: 1, kind: input, shape index: {}]
  %s2 = inlined_call_operand.vmem [shape: f32[1,128], index: 2, kind: input, shape index: {}]
  %s3 = inlined_call_operand.hbm [shape: f32[8,128], index: 3, kind: output, shape index: {}]
  %s4 = sld [smem:[#allocation0]]
  $region30: #{tpu_custom_call.1} parent=0
    _
  %s6 = ssub.s32 1, %s4
  %s7 = scalar_select 0, %s6, %s4
  $region1: #{tpu_custom_call.1} parent=0
    #allocation2 [shape = 'u8[16384]{0}', space=vmem, size = 0x4000, scoped, tag = 'input window, operand 0, single buffered']
    #allocation3 [shape = 's32[1]{0}', space=sflag, size = 0x4, scoped, tag = 'scoped memory for tpu_custom_call.1']
    #allocation4 [shape = 's32[1]{0}', space=sflag, size = 0x4, scoped, tag = 'scoped memory for tpu_custom_call.1']
    #allocation5 [shape = 'u8[262144]{0}', space=vmem, size = 0x40000, scoped, tag = 'input window, operand 1, single buffered']
    #allocation6 [shape = 's32[1]{0}', space=sflag, size = 0x4, scoped, tag = 'scoped memory for tpu_custom_call.1']
    #allocation7 [shape = 'u8[4096]{0}', space=vmem, size = 0x1000, scoped, tag = 'output window, operand 0, single buffered']
    %8 = vsyncpa [#allocation3], 0
    %9 = vsyncpa [#allocation6], 0
    %10 = vsyncpa [#allocation4], 0
    // Predicated region
    $region2: #{tpu_custom_call.1} parent=1 // pred_check
      _
    $region3: #{tpu_custom_call.1} parent=1 // pred_check_branch
      %12 = sbr.rel (0) target = $region5
    $region4: #{tpu_custom_call.1} parent=1 // pred_region
      %s14 = ssub.s32 512, 512
      %15 = vsyncadd [#allocation3], %s14
      %s17 = sshll.u32 [#allocation2], 4
      %s18 = int_to_ptr.vmem [resolvable:$true] %s17
      %20 = dma.hbm_to_vmem [thread:$0]  %s0, 512, %s18, [#allocation3]
    $region5: #{tpu_custom_call.1} parent=1 // pred_fallthru
      _
    // Predicated region
    $region6: #{tpu_custom_call.1} parent=1 // pred_check
      _
    $region7: #{tpu_custom_call.1} parent=1 // pred_check_branch
      %22 = sbr.rel (0) target = $region9
    $region8: #{tpu_custom_call.1} parent=1 // pred_region
      %s24 = ssub.s32 8192, 8192
      %25 = vsyncadd [#allocation6], %s24
      %s26 = sshll.u32 [#allocation5], 4
      %s27 = int_to_ptr.vmem [resolvable:$true] %s26
      %32 = dma.hbm_to_vmem [thread:$0]  %s1, 8192, %s27, [#allocation6], 64, 64, 4
    $region9: #{tpu_custom_call.1} parent=1 // pred_fallthru
      _
    // Predicated region
    $region10: #{tpu_custom_call.1} parent=1 // pred_check
      _
    $region11: #{tpu_custom_call.1} parent=1 // pred_check_branch
      %34 = sbr.rel (0) target = $region13
    $region12: #{tpu_custom_call.1} parent=1 // pred_region
      _
    $region13: #{tpu_custom_call.1} parent=1 // pred_fallthru
      _
    // Predicated region
    $region14: #{tpu_custom_call.1} parent=1 // pred_check
      _
    $region15: #{tpu_custom_call.1} parent=1 // pred_check_branch
      %36 = sbr.rel (0) target = $region17
    $region16: #{tpu_custom_call.1} parent=1 // pred_region
      %37 = dma.done [#allocation3], 512
    $region17: #{tpu_custom_call.1} parent=1 // pred_fallthru
      _
    // Predicated region
    $region18: #{tpu_custom_call.1} parent=1 // pred_check
      _
    $region19: #{tpu_custom_call.1} parent=1 // pred_check_branch
      %39 = sbr.rel (0) target = $region21
    $region20: #{tpu_custom_call.1} parent=1 // pred_region
      %40 = dma.done [#allocation6], 8192
    $region21: #{tpu_custom_call.1} parent=1 // pred_fallthru
      _
    %v42 = vld [vmem:[#allocation2] sm:$0xff]
    %v43 = vld [vmem:[#allocation2 + $0x8] sm:$0xff]
    %v44 = vld [vmem:[#allocation2 + $0x10] sm:$0xff]
    %v45 = vld [vmem:[#allocation2 + $0x18] sm:$0xff]
    %v46 = vld [vmem:[#allocation5] sm:$0xf]
    %v47 = vld [vmem:[#allocation5 + $0x4] sm:$0xf]
    %v48 = vld [vmem:[#allocation5 + $0x8] sm:$0xf]
    %v49 = vld [vmem:[#allocation5 + $0xc] sm:$0xf]
    %v50 = vld [vmem:[#allocation5 + $0x10] sm:$0xf]
    %v51 = vld [vmem:[#allocation5 + $0x14] sm:$0xf]
    %v52 = vld [vmem:[#allocation5 + $0x18] sm:$0xf]
    %v53 = vld [vmem:[#allocation5 + $0x1c] sm:$0xf]
    %v54 = vld [vmem:[#allocation5 + $0x20] sm:$0xf]
    %v55 = vld [vmem:[#allocation5 + $0x24] sm:$0xf]
    %v56 = vld [vmem:[#allocation5 + $0x28] sm:$0xf]
    %v57 = vld [vmem:[#allocation5 + $0x2c] sm:$0xf]
    %v58 = vld [vmem:[#allocation5 + $0x30] sm:$0xf]
    %v59 = vld [vmem:[#allocation5 + $0x34] sm:$0xf]
    %v60 = vld [vmem:[#allocation5 + $0x38] sm:$0xf]
    %v61 = vld [vmem:[#allocation5 + $0x3c] sm:$0xf]
    %v62 = vld [vmem:[#allocation5 + $0x40] sm:$0xf]
    %v63 = vld [vmem:[#allocation5 + $0x44] sm:$0xf]
    %v64 = vld [vmem:[#allocation5 + $0x48] sm:$0xf]
    %v65 = vld [vmem:[#allocation5 + $0x4c] sm:$0xf]
    %v66 = vld [vmem:[#allocation5 + $0x50] sm:$0xf]
    %v67 = vld [vmem:[#allocation5 + $0x54] sm:$0xf]
    %v68 = vld [vmem:[#allocation5 + $0x58] sm:$0xf]
    %v69 = vld [vmem:[#allocation5 + $0x5c] sm:$0xf]
    %v70 = vld [vmem:[#allocation5 + $0x60] sm:$0xf]
    %v71 = vld [vmem:[#allocation5 + $0x64] sm:$0xf]
    %v72 = vld [vmem:[#allocation5 + $0x68] sm:$0xf]
    %v73 = vld [vmem:[#allocation5 + $0x6c] sm:$0xf]
    %v74 = vld [vmem:[#allocation5 + $0x70] sm:$0xf]
    %v75 = vld [vmem:[#allocation5 + $0x74] sm:$0xf]
    %v76 = vld [vmem:[#allocation5 + $0x78] sm:$0xf]
    %v77 = vld [vmem:[#allocation5 + $0x7c] sm:$0xf]
    %v78 = vld [vmem:[#allocation5 + $0x80] sm:$0xf]
    %v79 = vld [vmem:[#allocation5 + $0x84] sm:$0xf]
    %v80 = vld [vmem:[#allocation5 + $0x88] sm:$0xf]
    %v81 = vld [vmem:[#allocation5 + $0x8c] sm:$0xf]
    %v82 = vld [vmem:[#allocation5 + $0x90] sm:$0xf]
    %v83 = vld [vmem:[#allocation5 + $0x94] sm:$0xf]
    %v84 = vld [vmem:[#allocation5 + $0x98] sm:$0xf]
    %v85 = vld [vmem:[#allocation5 + $0x9c] sm:$0xf]
    %v86 = vld [vmem:[#allocation5 + $0xa0] sm:$0xf]
    %v87 = vld [vmem:[#allocation5 + $0xa4] sm:$0xf]
    %v88 = vld [vmem:[#allocation5 + $0xa8] sm:$0xf]
    %v89 = vld [vmem:[#allocation5 + $0xac] sm:$0xf]
    %v90 = vld [vmem:[#allocation5 + $0xb0] sm:$0xf]
    %v91 = vld [vmem:[#allocation5 + $0xb4] sm:$0xf]
    %v92 = vld [vmem:[#allocation5 + $0xb8] sm:$0xf]
    %v93 = vld [vmem:[#allocation5 + $0xbc] sm:$0xf]
    %v94 = vld [vmem:[#allocation5 + $0xc0] sm:$0xf]
    %v95 = vld [vmem:[#allocation5 + $0xc4] sm:$0xf]
    %v96 = vld [vmem:[#allocation5 + $0xc8] sm:$0xf]
    %v97 = vld [vmem:[#allocation5 + $0xcc] sm:$0xf]
    %v98 = vld [vmem:[#allocation5 + $0xd0] sm:$0xf]
    %v99 = vld [vmem:[#allocation5 + $0xd4] sm:$0xf]
    %v100 = vld [vmem:[#allocation5 + $0xd8] sm:$0xf]
    %v101 = vld [vmem:[#allocation5 + $0xdc] sm:$0xf]
    %v102 = vld [vmem:[#allocation5 + $0xe0] sm:$0xf]
    %v103 = vld [vmem:[#allocation5 + $0xe4] sm:$0xf]
    %v104 = vld [vmem:[#allocation5 + $0xe8] sm:$0xf]
    %v105 = vld [vmem:[#allocation5 + $0xec] sm:$0xf]
    %v106 = vld [vmem:[#allocation5 + $0xf0] sm:$0xf]
    %v107 = vld [vmem:[#allocation5 + $0xf4] sm:$0xf]
    %v108 = vld [vmem:[#allocation5 + $0xf8] sm:$0xf]
    %v109 = vld [vmem:[#allocation5 + $0xfc] sm:$0xf]
    %v110 = vld [vmem:[#allocation5 + $0x100] sm:$0xf]
    %v111 = vld [vmem:[#allocation5 + $0x104] sm:$0xf]
    %v112 = vld [vmem:[#allocation5 + $0x108] sm:$0xf]
    %v113 = vld [vmem:[#allocation5 + $0x10c] sm:$0xf]
    %v114 = vld [vmem:[#allocation5 + $0x110] sm:$0xf]
    %v115 = vld [vmem:[#allocation5 + $0x114] sm:$0xf]
    %v116 = vld [vmem:[#allocation5 + $0x118] sm:$0xf]
    %v117 = vld [vmem:[#allocation5 + $0x11c] sm:$0xf]
    %v118 = vld [vmem:[#allocation5 + $0x120] sm:$0xf]
    %v119 = vld [vmem:[#allocation5 + $0x124] sm:$0xf]
    %v120 = vld [vmem:[#allocation5 + $0x128] sm:$0xf]
    %v121 = vld [vmem:[#allocation5 + $0x12c] sm:$0xf]
    %v122 = vld [vmem:[#allocation5 + $0x130] sm:$0xf]
    %v123 = vld [vmem:[#allocation5 + $0x134] sm:$0xf]
    %v124 = vld [vmem:[#allocation5 + $0x138] sm:$0xf]
    %v125 = vld [vmem:[#allocation5 + $0x13c] sm:$0xf]
    %v126 = vld [vmem:[#allocation5 + $0x140] sm:$0xf]
    %v127 = vld [vmem:[#allocation5 + $0x144] sm:$0xf]
    %v128 = vld [vmem:[#allocation5 + $0x148] sm:$0xf]
    %v129 = vld [vmem:[#allocation5 + $0x14c] sm:$0xf]
    %v130 = vld [vmem:[#allocation5 + $0x150] sm:$0xf]
    %v131 = vld [vmem:[#allocation5 + $0x154] sm:$0xf]
    %v132 = vld [vmem:[#allocation5 + $0x158] sm:$0xf]
    %v133 = vld [vmem:[#allocation5 + $0x15c] sm:$0xf]
    %v134 = vld [vmem:[#allocation5 + $0x160] sm:$0xf]
    %v135 = vld [vmem:[#allocation5 + $0x164] sm:$0xf]
    %v136 = vld [vmem:[#allocation5 + $0x168] sm:$0xf]
    %v137 = vld [vmem:[#allocation5 + $0x16c] sm:$0xf]
    %v138 = vld [vmem:[#allocation5 + $0x170] sm:$0xf]
    %v139 = vld [vmem:[#allocation5 + $0x174] sm:$0xf]
    %v140 = vld [vmem:[#allocation5 + $0x178] sm:$0xf]
    %v141 = vld [vmem:[#allocation5 + $0x17c] sm:$0xf]
    %v142 = vld [vmem:[#allocation5 + $0x180] sm:$0xf]
    %v143 = vld [vmem:[#allocation5 + $0x184] sm:$0xf]
    %v144 = vld [vmem:[#allocation5 + $0x188] sm:$0xf]
    %v145 = vld [vmem:[#allocation5 + $0x18c] sm:$0xf]
    %v146 = vld [vmem:[#allocation5 + $0x190] sm:$0xf]
    %v147 = vld [vmem:[#allocation5 + $0x194] sm:$0xf]
    %v148 = vld [vmem:[#allocation5 + $0x198] sm:$0xf]
    %v149 = vld [vmem:[#allocation5 + $0x19c] sm:$0xf]
    %v150 = vld [vmem:[#allocation5 + $0x1a0] sm:$0xf]
    %v151 = vld [vmem:[#allocation5 + $0x1a4] sm:$0xf]
    %v152 = vld [vmem:[#allocation5 + $0x1a8] sm:$0xf]
    %v153 = vld [vmem:[#allocation5 + $0x1ac] sm:$0xf]
    %v154 = vld [vmem:[#allocation5 + $0x1b0] sm:$0xf]
    %v155 = vld [vmem:[#allocation5 + $0x1b4] sm:$0xf]
    %v156 = vld [vmem:[#allocation5 + $0x1b8] sm:$0xf]
    %v157 = vld [vmem:[#allocation5 + $0x1bc] sm:$0xf]
    %v158 = vld [vmem:[#allocation5 + $0x1c0] sm:$0xf]
    %v159 = vld [vmem:[#allocation5 + $0x1c4] sm:$0xf]
    %v160 = vld [vmem:[#allocation5 + $0x1c8] sm:$0xf]
    %v161 = vld [vmem:[#allocation5 + $0x1cc] sm:$0xf]
    %v162 = vld [vmem:[#allocation5 + $0x1d0] sm:$0xf]
    %v163 = vld [vmem:[#allocation5 + $0x1d4] sm:$0xf]
    %v164 = vld [vmem:[#allocation5 + $0x1d8] sm:$0xf]
    %v165 = vld [vmem:[#allocation5 + $0x1dc] sm:$0xf]
    %v166 = vld [vmem:[#allocation5 + $0x1e0] sm:$0xf]
    %v167 = vld [vmem:[#allocation5 + $0x1e4] sm:$0xf]
    %v168 = vld [vmem:[#allocation5 + $0x1e8] sm:$0xf]
    %v169 = vld [vmem:[#allocation5 + $0x1ec] sm:$0xf]
    %v170 = vld [vmem:[#allocation5 + $0x1f0] sm:$0xf]
    %v171 = vld [vmem:[#allocation5 + $0x1f4] sm:$0xf]
    %v172 = vld [vmem:[#allocation5 + $0x1f8] sm:$0xf]
    %v173 = vld [vmem:[#allocation5 + $0x1fc] sm:$0xf]
    %v178 = vunpack.c.l.b16 %v42
    %v179 = vunpack.c.h.b16 %v42
    %v180 = vunpack.c.l.b16 %v43
    %v181 = vunpack.c.h.b16 %v43
    %v182 = vunpack.c.l.b16 %v44
    %v183 = vunpack.c.h.b16 %v44
    %v184 = vunpack.c.l.b16 %v45
    %v185 = vunpack.c.h.b16 %v45
    %v186 = vpack.c.b16 %v178, %v178
    %v187 = vpack.c.b16 %v179, %v179
    %v188 = vpack.c.b16 %v180, %v180
    %v189 = vpack.c.b16 %v181, %v181
    %v190 = vpack.c.b16 %v182, %v182
    %v191 = vpack.c.b16 %v183, %v183
    %v192 = vpack.c.b16 %v184, %v184
    %v193 = vpack.c.b16 %v185, %v185
    %v330 = vunpack.c.l.b16 %v46
    %v331 = vunpack.c.l.b16 %v47
    %v332 = vunpack.c.l.b16 %v48
    %v333 = vunpack.c.l.b16 %v49
    %v334 = vunpack.c.l.b16 %v50
    %v335 = vunpack.c.l.b16 %v51
    %v336 = vunpack.c.l.b16 %v52
    %v337 = vunpack.c.l.b16 %v53
    %v338 = vunpack.c.l.b16 %v54
    %v339 = vunpack.c.l.b16 %v55
    %v340 = vunpack.c.l.b16 %v56
    %v341 = vunpack.c.l.b16 %v57
    %v342 = vunpack.c.l.b16 %v58
    %v343 = vunpack.c.l.b16 %v59
    %v344 = vunpack.c.l.b16 %v60
    %v345 = vunpack.c.l.b16 %v61
    %v346 = vunpack.c.l.b16 %v62
    %v347 = vunpack.c.l.b16 %v63
    %v348 = vunpack.c.l.b16 %v64
    %v349 = vunpack.c.l.b16 %v65
    %v350 = vunpack.c.l.b16 %v66
    %v351 = vunpack.c.l.b16 %v67
    %v352 = vunpack.c.l.b16 %v68
    %v353 = vunpack.c.l.b16 %v69
    %v354 = vunpack.c.l.b16 %v70
    %v355 = vunpack.c.l.b16 %v71
    %v356 = vunpack.c.l.b16 %v72
    %v357 = vunpack.c.l.b16 %v73
    %v358 = vunpack.c.l.b16 %v74
    %v359 = vunpack.c.l.b16 %v75
    %v360 = vunpack.c.l.b16 %v76
    %v361 = vunpack.c.l.b16 %v77
    %v362 = vunpack.c.l.b16 %v78
    %v363 = vunpack.c.l.b16 %v79
    %v364 = vunpack.c.l.b16 %v80
    %v365 = vunpack.c.l.b16 %v81
    %v366 = vunpack.c.l.b16 %v82
    %v367 = vunpack.c.l.b16 %v83
    %v368 = vunpack.c.l.b16 %v84
    %v369 = vunpack.c.l.b16 %v85
    %v370 = vunpack.c.l.b16 %v86
    %v371 = vunpack.c.l.b16 %v87
    %v372 = vunpack.c.l.b16 %v88
    %v373 = vunpack.c.l.b16 %v89
    %v374 = vunpack.c.l.b16 %v90
    %v375 = vunpack.c.l.b16 %v91
    %v376 = vunpack.c.l.b16 %v92
    %v377 = vunpack.c.l.b16 %v93
    %v378 = vunpack.c.l.b16 %v94
    %v379 = vunpack.c.l.b16 %v95
    %v380 = vunpack.c.l.b16 %v96
    %v381 = vunpack.c.l.b16 %v97
    %v382 = vunpack.c.l.b16 %v98
    %v383 = vunpack.c.l.b16 %v99
    %v384 = vunpack.c.l.b16 %v100
    %v385 = vunpack.c.l.b16 %v101
    %v386 = vunpack.c.l.b16 %v102
    %v387 = vunpack.c.l.b16 %v103
    %v388 = vunpack.c.l.b16 %v104
    %v389 = vunpack.c.l.b16 %v105
    %v390 = vunpack.c.l.b16 %v106
    %v391 = vunpack.c.l.b16 %v107
    %v392 = vunpack.c.l.b16 %v108
    %v393 = vunpack.c.l.b16 %v109
    %v394 = vunpack.c.l.b16 %v110
    %v395 = vunpack.c.l.b16 %v111
    %v396 = vunpack.c.l.b16 %v112
    %v397 = vunpack.c.l.b16 %v113
    %v398 = vunpack.c.l.b16 %v114
    %v399 = vunpack.c.l.b16 %v115
    %v400 = vunpack.c.l.b16 %v116
    %v401 = vunpack.c.l.b16 %v117
    %v402 = vunpack.c.l.b16 %v118
    %v403 = vunpack.c.l.b16 %v119
    %v404 = vunpack.c.l.b16 %v120
    %v405 = vunpack.c.l.b16 %v121
    %v406 = vunpack.c.l.b16 %v122
    %v407 = vunpack.c.l.b16 %v123
    %v408 = vunpack.c.l.b16 %v124
    %v409 = vunpack.c.l.b16 %v125
    %v410 = vunpack.c.l.b16 %v126
    %v411 = vunpack.c.l.b16 %v127
    %v412 = vunpack.c.l.b16 %v128
    %v413 = vunpack.c.l.b16 %v129
    %v414 = vunpack.c.l.b16 %v130
    %v415 = vunpack.c.l.b16 %v131
    %v416 = vunpack.c.l.b16 %v132
    %v417 = vunpack.c.l.b16 %v133
    %v418 = vunpack.c.l.b16 %v134
    %v419 = vunpack.c.l.b16 %v135
    %v420 = vunpack.c.l.b16 %v136
    %v421 = vunpack.c.l.b16 %v137
    %v422 = vunpack.c.l.b16 %v138
    %v423 = vunpack.c.l.b16 %v139
    %v424 = vunpack.c.l.b16 %v140
    %v425 = vunpack.c.l.b16 %v141
    %v426 = vunpack.c.l.b16 %v142
    %v427 = vunpack.c.l.b16 %v143
    %v428 = vunpack.c.l.b16 %v144
    %v429 = vunpack.c.l.b16 %v145
    %v430 = vunpack.c.l.b16 %v146
    %v431 = vunpack.c.l.b16 %v147
    %v432 = vunpack.c.l.b16 %v148
    %v433 = vunpack.c.l.b16 %v149
    %v434 = vunpack.c.l.b16 %v150
    %v435 = vunpack.c.l.b16 %v151
    %v436 = vunpack.c.l.b16 %v152
    %v437 = vunpack.c.l.b16 %v153
    %v438 = vunpack.c.l.b16 %v154
    %v439 = vunpack.c.l.b16 %v155
    %v440 = vunpack.c.l.b16 %v156
    %v441 = vunpack.c.l.b16 %v157
    %v442 = vunpack.c.l.b16 %v158
    %v443 = vunpack.c.l.b16 %v159
    %v444 = vunpack.c.l.b16 %v160
    %v445 = vunpack.c.l.b16 %v161
    %v446 = vunpack.c.l.b16 %v162
    %v447 = vunpack.c.l.b16 %v163
    %v448 = vunpack.c.l.b16 %v164
    %v449 = vunpack.c.l.b16 %v165
    %v450 = vunpack.c.l.b16 %v166
    %v451 = vunpack.c.l.b16 %v167
    %v452 = vunpack.c.l.b16 %v168
    %v453 = vunpack.c.l.b16 %v169
    %v454 = vunpack.c.l.b16 %v170
    %v455 = vunpack.c.l.b16 %v171
    %v456 = vunpack.c.l.b16 %v172
    %v457 = vunpack.c.l.b16 %v173
    %v458 = vpack.c.b16 %v331, %v330
    %v459 = vpack.c.b16 %v333, %v332
    %v460 = vpack.c.b16 %v335, %v334
    %v461 = vpack.c.b16 %v337, %v336
    %v462 = vpack.c.b16 %v339, %v338
    %v463 = vpack.c.b16 %v341, %v340
    %v464 = vpack.c.b16 %v343, %v342
    %v465 = vpack.c.b16 %v345, %v344
    %v466 = vpack.c.b16 %v347, %v346
    %v467 = vpack.c.b16 %v349, %v348
    %v468 = vpack.c.b16 %v351, %v350
    %v469 = vpack.c.b16 %v353, %v352
    %v470 = vpack.c.b16 %v355, %v354
    %v471 = vpack.c.b16 %v357, %v356
    %v472 = vpack.c.b16 %v359, %v358
    %v473 = vpack.c.b16 %v361, %v360
    %v474 = vpack.c.b16 %v363, %v362
    %v475 = vpack.c.b16 %v365, %v364
    %v476 = vpack.c.b16 %v367, %v366
    %v477 = vpack.c.b16 %v369, %v368
    %v478 = vpack.c.b16 %v371, %v370
    %v479 = vpack.c.b16 %v373, %v372
    %v480 = vpack.c.b16 %v375, %v374
    %v481 = vpack.c.b16 %v377, %v376
    %v482 = vpack.c.b16 %v379, %v378
    %v483 = vpack.c.b16 %v381, %v380
    %v484 = vpack.c.b16 %v383, %v382
    %v485 = vpack.c.b16 %v385, %v384
    %v486 = vpack.c.b16 %v387, %v386
    %v487 = vpack.c.b16 %v389, %v388
    %v488 = vpack.c.b16 %v391, %v390
    %v489 = vpack.c.b16 %v393, %v392
    %v490 = vpack.c.b16 %v395, %v394
    %v491 = vpack.c.b16 %v397, %v396
    %v492 = vpack.c.b16 %v399, %v398
    %v493 = vpack.c.b16 %v401, %v400
    %v494 = vpack.c.b16 %v403, %v402
    %v495 = vpack.c.b16 %v405, %v404
    %v496 = vpack.c.b16 %v407, %v406
    %v497 = vpack.c.b16 %v409, %v408
    %v498 = vpack.c.b16 %v411, %v410
    %v499 = vpack.c.b16 %v413, %v412
    %v500 = vpack.c.b16 %v415, %v414
    %v501 = vpack.c.b16 %v417, %v416
    %v502 = vpack.c.b16 %v419, %v418
    %v503 = vpack.c.b16 %v421, %v420
    %v504 = vpack.c.b16 %v423, %v422
    %v505 = vpack.c.b16 %v425, %v424
    %v506 = vpack.c.b16 %v427, %v426
    %v507 = vpack.c.b16 %v429, %v428
    %v508 = vpack.c.b16 %v431, %v430
    %v509 = vpack.c.b16 %v433, %v432
    %v510 = vpack.c.b16 %v435, %v434
    %v511 = vpack.c.b16 %v437, %v436
    %v512 = vpack.c.b16 %v439, %v438
    %v513 = vpack.c.b16 %v441, %v440
    %v514 = vpack.c.b16 %v443, %v442
    %v515 = vpack.c.b16 %v445, %v444
    %v516 = vpack.c.b16 %v447, %v446
    %v517 = vpack.c.b16 %v449, %v448
    %v518 = vpack.c.b16 %v451, %v450
    %v519 = vpack.c.b16 %v453, %v452
    %v520 = vpack.c.b16 %v455, %v454
    %v521 = vpack.c.b16 %v457, %v456
    %586 = vmatprep.subr.bf16.mxu0 0
    %587 = vmatpush1.bf16.msra.mxu0 %v458
    %588 = vmatprep.subr.bf16.mxu0 0
    %589 = vmatpush1.bf16.msra.mxu0 %v459
    %590 = vmatprep.subr.bf16.mxu0 0
    %591 = vmatpush1.bf16.msra.mxu0 %v460
    %592 = vmatprep.subr.bf16.mxu0 0
    %593 = vmatpush1.bf16.msra.mxu0 %v461
    %594 = vmatprep.subr.bf16.mxu0 0
    %595 = vmatpush1.bf16.msra.mxu0 %v462
    %596 = vmatprep.subr.bf16.mxu0 0
    %597 = vmatpush1.bf16.msra.mxu0 %v463
    %598 = vmatprep.subr.bf16.mxu0 0
    %599 = vmatpush1.bf16.msra.mxu0 %v464
    %600 = vmatprep.subr.bf16.mxu0 0
    %601 = vmatpush1.bf16.msra.mxu0 %v465
    %602 = vmatprep.subr.bf16.mxu0 0
    %603 = vmatpush1.bf16.msra.mxu0 %v466
    %604 = vmatprep.subr.bf16.mxu0 0
    %605 = vmatpush1.bf16.msra.mxu0 %v467
    %606 = vmatprep.subr.bf16.mxu0 0
    %607 = vmatpush1.bf16.msra.mxu0 %v468
    %608 = vmatprep.subr.bf16.mxu0 0
    %609 = vmatpush1.bf16.msra.mxu0 %v469
    %610 = vmatprep.subr.bf16.mxu0 0
    %611 = vmatpush1.bf16.msra.mxu0 %v470
    %612 = vmatprep.subr.bf16.mxu0 0
    %613 = vmatpush1.bf16.msra.mxu0 %v471
    %614 = vmatprep.subr.bf16.mxu0 0
    %615 = vmatpush1.bf16.msra.mxu0 %v472
    %616 = vmatprep.subr.bf16.mxu0 0
    %617 = vmatpush1.bf16.msra.mxu0 %v473
    %618 = vmatprep.mubr.bf16.mxu0 %v187
    %619 = vmatmul.mubr.bf16.gmra.mrb[0].mxu0 %v186
    %v620 = vpop.f32.mrb[0].mxu0
    %v621 = vadd.f32 0.0, %v620
    %v622 = vpop.f32.mrb[0].mxu0
    %v623 = vpop.f32.mrb[0].mxu0
    %v624 = vpop.f32.mrb[0].mxu0
    %625 = vdwg.mxu0
    %626 = vmatprep.subr.bf16.mxu0 0
    %627 = vmatpush1.bf16.msra.mxu0 %v474
    %628 = vmatprep.subr.bf16.mxu0 0
    %629 = vmatpush1.bf16.msra.mxu0 %v475
    %630 = vmatprep.subr.bf16.mxu0 0
    %631 = vmatpush1.bf16.msra.mxu0 %v476
    %632 = vmatprep.subr.bf16.mxu0 0
    %633 = vmatpush1.bf16.msra.mxu0 %v477
    %634 = vmatprep.subr.bf16.mxu0 0
    %635 = vmatpush1.bf16.msra.mxu0 %v478
    %636 = vmatprep.subr.bf16.mxu0 0
    %637 = vmatpush1.bf16.msra.mxu0 %v479
    %638 = vmatprep.subr.bf16.mxu0 0
    %639 = vmatpush1.bf16.msra.mxu0 %v480
    %640 = vmatprep.subr.bf16.mxu0 0
    %641 = vmatpush1.bf16.msra.mxu0 %v481
    %642 = vmatprep.subr.bf16.mxu0 0
    %643 = vmatpush1.bf16.msra.mxu0 %v482
    %644 = vmatprep.subr.bf16.mxu0 0
    %645 = vmatpush1.bf16.msra.mxu0 %v483
    %646 = vmatprep.subr.bf16.mxu0 0
    %647 = vmatpush1.bf16.msra.mxu0 %v484
    %648 = vmatprep.subr.bf16.mxu0 0
    %649 = vmatpush1.bf16.msra.mxu0 %v485
    %650 = vmatprep.subr.bf16.mxu0 0
    %651 = vmatpush1.bf16.msra.mxu0 %v486
    %652 = vmatprep.subr.bf16.mxu0 0
    %653 = vmatpush1.bf16.msra.mxu0 %v487
    %654 = vmatprep.subr.bf16.mxu0 0
    %655 = vmatpush1.bf16.msra.mxu0 %v488
    %656 = vmatprep.subr.bf16.mxu0 0
    %657 = vmatpush1.bf16.msra.mxu0 %v489
    %658 = vmatprep.mubr.bf16.mxu0 %v189
    %659 = vmatmul.mubr.bf16.gmra.mrb[0].mxu0 %v188
    %v660 = vpop.f32.mrb[0].mxu0
    %v661 = vadd.f32 %v621, %v660
    %v662 = vpop.f32.mrb[0].mxu0
    %v663 = vpop.f32.mrb[0].mxu0
    %v664 = vpop.f32.mrb[0].mxu0
    %665 = vdwg.mxu0
    %666 = vmatprep.subr.bf16.mxu0 0
    %667 = vmatpush1.bf16.msra.mxu0 %v490
    %668 = vmatprep.subr.bf16.mxu0 0
    %669 = vmatpush1.bf16.msra.mxu0 %v491
    %670 = vmatprep.subr.bf16.mxu0 0
    %671 = vmatpush1.bf16.msra.mxu0 %v492
    %672 = vmatprep.subr.bf16.mxu0 0
    %673 = vmatpush1.bf16.msra.mxu0 %v493
    %674 = vmatprep.subr.bf16.mxu0 0
    %675 = vmatpush1.bf16.msra.mxu0 %v494
    %676 = vmatprep.subr.bf16.mxu0 0
    %677 = vmatpush1.bf16.msra.mxu0 %v495
    %678 = vmatprep.subr.bf16.mxu0 0
    %679 = vmatpush1.bf16.msra.mxu0 %v496
    %680 = vmatprep.subr.bf16.mxu0 0
    %681 = vmatpush1.bf16.msra.mxu0 %v497
    %682 = vmatprep.subr.bf16.mxu0 0
    %683 = vmatpush1.bf16.msra.mxu0 %v498
    %684 = vmatprep.subr.bf16.mxu0 0
    %685 = vmatpush1.bf16.msra.mxu0 %v499
    %686 = vmatprep.subr.bf16.mxu0 0
    %687 = vmatpush1.bf16.msra.mxu0 %v500
    %688 = vmatprep.subr.bf16.mxu0 0
    %689 = vmatpush1.bf16.msra.mxu0 %v501
    %690 = vmatprep.subr.bf16.mxu0 0
    %691 = vmatpush1.bf16.msra.mxu0 %v502
    %692 = vmatprep.subr.bf16.mxu0 0
    %693 = vmatpush1.bf16.msra.mxu0 %v503
    %694 = vmatprep.subr.bf16.mxu0 0
    %695 = vmatpush1.bf16.msra.mxu0 %v504
    %696 = vmatprep.subr.bf16.mxu0 0
    %697 = vmatpush1.bf16.msra.mxu0 %v505
    %698 = vmatprep.mubr.bf16.mxu0 %v191
    %699 = vmatmul.mubr.bf16.gmra.mrb[0].mxu0 %v190
    %v700 = vpop.f32.mrb[0].mxu0
    %v701 = vadd.f32 %v661, %v700
    %v702 = vpop.f32.mrb[0].mxu0
    %v703 = vpop.f32.mrb[0].mxu0
    %v704 = vpop.f32.mrb[0].mxu0
    %705 = vdwg.mxu0
    %706 = vmatprep.subr.bf16.mxu0 0
    %707 = vmatpush1.bf16.msra.mxu0 %v506
    %708 = vmatprep.subr.bf16.mxu0 0
    %709 = vmatpush1.bf16.msra.mxu0 %v507
    %710 = vmatprep.subr.bf16.mxu0 0
    %711 = vmatpush1.bf16.msra.mxu0 %v508
    %712 = vmatprep.subr.bf16.mxu0 0
    %713 = vmatpush1.bf16.msra.mxu0 %v509
    %714 = vmatprep.subr.bf16.mxu0 0
    %715 = vmatpush1.bf16.msra.mxu0 %v510
    %716 = vmatprep.subr.bf16.mxu0 0
    %717 = vmatpush1.bf16.msra.mxu0 %v511
    %718 = vmatprep.subr.bf16.mxu0 0
    %719 = vmatpush1.bf16.msra.mxu0 %v512
    %720 = vmatprep.subr.bf16.mxu0 0
    %721 = vmatpush1.bf16.msra.mxu0 %v513
    %722 = vmatprep.subr.bf16.mxu0 0
    %723 = vmatpush1.bf16.msra.mxu0 %v514
    %724 = vmatprep.subr.bf16.mxu0 0
    %725 = vmatpush1.bf16.msra.mxu0 %v515
    %726 = vmatprep.subr.bf16.mxu0 0
    %727 = vmatpush1.bf16.msra.mxu0 %v516
    %728 = vmatprep.subr.bf16.mxu0 0
    %729 = vmatpush1.bf16.msra.mxu0 %v517
    %730 = vmatprep.subr.bf16.mxu0 0
    %731 = vmatpush1.bf16.msra.mxu0 %v518
    %732 = vmatprep.subr.bf16.mxu0 0
    %733 = vmatpush1.bf16.msra.mxu0 %v519
    %734 = vmatprep.subr.bf16.mxu0 0
    %735 = vmatpush1.bf16.msra.mxu0 %v520
    %736 = vmatprep.subr.bf16.mxu0 0
    %737 = vmatpush1.bf16.msra.mxu0 %v521
    %738 = vmatprep.mubr.bf16.mxu0 %v193
    %739 = vmatmul.mubr.bf16.gmra.mrb[0].mxu0 %v192
    %v740 = vpop.f32.mrb[0].mxu0
    %v741 = vadd.f32 %v701, %v740
    %v742 = vpop.f32.mrb[0].mxu0
    %v743 = vpop.f32.mrb[0].mxu0
    %v744 = vpop.f32.mrb[0].mxu0
    %745 = vdwg.mxu0
    %v746 = vld [vmem:[%s2] sm:$0x1]
    %v748 = vlaneseq
    %v749 = vshrl.u32 %v748, 7
    %v750 = vsub.s32 0, %v749
    %v751 = vrot.slane %v746, %v750
    %v753 = vmul.f32 %v741, %v751
    %754 = vst [vmem:[#allocation7] sm:$0xff] %v753
    // Predicated region
    $region22: #{tpu_custom_call.1} parent=1 // pred_check
      _
    $region23: #{tpu_custom_call.1} parent=1 // pred_check_branch
      %756 = sbr.rel (0) target = $region25
    $region24: #{tpu_custom_call.1} parent=1 // pred_region
      %s758 = ssub.s32 128, 128
      %759 = vsyncadd [#allocation4], %s758
      %s761 = sshll.u32 [#allocation7], 4
      %s762 = int_to_ptr.vmem [resolvable:$true] %s761
      %764 = dma.vmem_to_hbm [thread:$0]  %s762, 128, %s3, [#allocation4]
    $region25: #{tpu_custom_call.1} parent=1 // pred_fallthru
      _
    // Predicated region
    $region26: #{tpu_custom_call.1} parent=1 // pred_check
      _
    $region27: #{tpu_custom_call.1} parent=1 // pred_check_branch
      %766 = sbr.rel (0) target = $region29
    $region28: #{tpu_custom_call.1} parent=1 // pred_region
      %767 = dma.done [#allocation4], 128
    $region29: #{tpu_custom_call.1} parent=1 // pred_fallthru
      _
    %768 = vsyncpa [#allocation3], 1
    %769 = vsyncpa [#allocation6], 1
    %770 = vsyncpa [#allocation4], 1

</llo_original>
